<compile_context>
chip_gen: v6e
topology: v6e:2x2x1
jax: 0.10.0
libtpu: 0.0.40
codegen_flags: <defaults>
</compile_context>

<pallas_src>
import jax
import jax.numpy as jnp
from jax.experimental import pallas as pl
from jax.experimental.pallas import tpu as pltpu

EPS = 1e-5


# --------------------------------- kernel ------------------------------------
def _preact_block_kernel(x_ref, s0_ref, b0_ref, nf_ref, nl_ref,
                         t1sc_ref, b1_ref, t2_ref, o_ref):
    """Whole batch in one gridless invocation.

    Layout: rows = (n, h) flattened (sublane axis), lanes = (w, c).
      x_ref    : (N*H, W*Cp)   f32, Cp padded so W*Cp == 128
      t1sc_ref : (3*W*Cp, 2*W*Cout) compute dtype  (conv1 Toeplitz w/ BN1 scale
                 folded in, concatenated with the zero-padded 1x1 shortcut)
      t2_ref   : (3*W*Cout, W*Cout) compute dtype
      o_ref    : (N*H, W*Cout) f32
    """
    nh, _ = x_ref.shape
    wco = o_ref.shape[-1]
    cdt = t1sc_ref.dtype

    # ---- preact: folded BN0 (scale/shift) + ReLU (padded lanes stay zero) ---
    pre = jnp.maximum(x_ref[...] * s0_ref[...] + b0_ref[...], 0.0)   # (NH, 128)

    nf = nf_ref[...]   # (NH, 1): 0.0 on the first row of each image, else 1.0
    nl = nl_ref[...]   # (NH, 1): 0.0 on the last  row of each image, else 1.0

    def im2col(act):
        # dy = 0 / 2 taps via sublane rotation (XLU) + row masks; dx taps and
        # width zero-padding are folded into the Toeplitz weights.
        up = pltpu.roll(act, shift=1, axis=0) * nf        # row h-1 (0 at h=0)
        dn = pltpu.roll(act, shift=nh - 1, axis=0) * nl   # row h+1 (0 at h=H-1)
        # lane-concat at 128-aligned offsets (0 / 128 / 256)
        return jnp.concatenate([up, act, dn], axis=1).astype(cdt)    # (NH, 384)

    # ---- conv1 (+ fused 1x1 shortcut): a single 256-wide-output matmul ------
    big = jnp.dot(im2col(pre), t1sc_ref[...],
                  preferred_element_type=jnp.float32)                # (NH, 256)
    h1 = jnp.maximum(big[:, :wco] + b1_ref[...], 0.0)   # BN1 scale already folded
    sc = big[:, wco:]                                    # shortcut (lane-aligned)

    # ---- conv2 + residual add ----------------------------------------------
    h2 = jnp.dot(im2col(h1), t2_ref[...],
                 preferred_element_type=jnp.float32)                 # (NH, 128)

    o_ref[...] = (h2 + sc).astype(o_ref.dtype)


# ------------------------------ weight prep ----------------------------------
def _toeplitz_conv3x3(w_hwio, W):
    """(3, 3, Ci, Co) -> (3*W*Ci, W*Co) block-Toeplitz matrix.

    Rows ordered (dy, w', ci), columns (w, co); entry is w[dy, w'-w+1, ci, co]
    when 0 <= w'-w+1 < 3, else 0 — the dx taps and the stride-1/pad-1 width
    zero-padding are folded into the matrix."""
    KH, KW, Ci, Co = w_hwio.shape
    dx = jnp.arange(W)[:, None] - jnp.arange(W)[None, :] + 1       # [w', w] -> dx
    valid = (dx >= 0) & (dx < KW)
    gathered = w_hwio[:, jnp.clip(dx, 0, KW - 1)]                  # (KH, W, W, Ci, Co)
    t = jnp.where(valid[None, :, :, None, None], gathered, 0.0)
    t = jnp.transpose(t, (0, 1, 3, 2, 4))                          # (dy, w', ci, w, co)
    return t.reshape(KH * W * Ci, W * Co)


def prepare_block(params, *, N, H, W, compute_dtype=jnp.bfloat16):
    """One-time weight preprocessing (hoisted out of the per-call path)."""
    w1, w2, wsc = params["w1_hwio"], params["w2_hwio"], params["wsc_io"]
    Cin, Cout = w1.shape[2], w1.shape[3]

    # Pad Cin so the input lane dim W*Cp is a full multiple of 128 (full vreg).
    WCi_pad = -(-(W * Cin) // 128) * 128
    Cp = WCi_pad // W if WCi_pad % W == 0 else Cin   # fallback: no padding
    pad_c = Cp - Cin

    def fold(g, b, m, v):
        s = g / jnp.sqrt(v + EPS)
        return s, b - m * s

    s0, b0 = fold(params["g0"], params["b0"], params["m0"], params["v0"])
    s1, b1 = fold(params["g1"], params["b1"], params["m1"], params["v1"])

    # Zero-pad the Cin-sided tensors; padded lanes then contribute nothing.
    s0 = jnp.pad(s0, (0, pad_c))
    b0 = jnp.pad(b0, (0, pad_c))
    w1p = jnp.pad(w1, ((0, 0), (0, 0), (0, pad_c), (0, 0)))
    wscp = jnp.pad(wsc, ((0, pad_c), (0, 0)))

    # conv1 Toeplitz with BN1 scale folded into its columns.
    t1 = _toeplitz_conv3x3(w1p, W) * jnp.tile(s1, W)[None, :]      # (3*W*Cp, W*Cout)
    # 1x1 shortcut as the dy=1 (center) row block only, zero elsewhere — so the
    # same im2col LHS drives both conv1 and the shortcut.
    sc_mid = jnp.kron(jnp.eye(W, dtype=jnp.float32), wscp)         # (W*Cp, W*Cout)
    zeros = jnp.zeros((W * Cp, W * Cout), jnp.float32)
    tsc = jnp.concatenate([zeros, sc_mid, zeros], axis=0)          # (3*W*Cp, W*Cout)
    t1sc = jnp.concatenate([t1, tsc], axis=1).astype(compute_dtype)  # (., 2*W*Cout)

    t2 = _toeplitz_conv3x3(w2, W).astype(compute_dtype)            # (3*W*Cout, W*Cout)

    # BN params tiled to the (w, c) lane layout.
    s0t = jnp.tile(s0, W).reshape(1, W * Cp)
    b0t = jnp.tile(b0, W).reshape(1, W * Cp)
    b1t = jnp.tile(b1, W).reshape(1, W * Cout)

    # Per-row masks zeroing dy-shifted rows that fall outside each image.
    row = jnp.arange(N * H)
    nf = (row % H != 0).astype(jnp.float32).reshape(N * H, 1)       # not-first
    nl = (row % H != H - 1).astype(jnp.float32).reshape(N * H, 1)   # not-last

    return dict(s0t=s0t, b0t=b0t, nf=nf, nl=nl, t1sc=t1sc, b1t=b1t, t2=t2)


# -------------------------------- apply --------------------------------------
def preact_basic_block(x_nchw, prep):
    """x_nchw: (N, Cin, H, W) f32; prep: output of prepare_block.
    Returns (N, Cout, H, W) f32."""
    N, Cin, H, W = x_nchw.shape
    WCp = prep["s0t"].shape[-1]
    WCo = prep["b1t"].shape[-1]
    Cp, Cout = WCp // W, WCo // W
    NH = N * H

    # NCHW -> NHWC -> zero-pad channels -> (N*H, W*Cp) lane-dense layout.
    # TODO(synk): these boundary transposes are an extra HBM round trip; drop
    #             them if the surrounding model can stay in the (N*H, W*C) layout.
    x = jnp.transpose(x_nchw, (0, 2, 3, 1)).astype(jnp.float32)
    x = jnp.pad(x, ((0, 0), (0, 0), (0, 0), (0, Cp - Cin)))
    x2d = x.reshape(NH, WCp)

    itemsize = jnp.dtype(prep["t1sc"].dtype).itemsize
    flops = 2 * NH * (prep["t1sc"].shape[0] * prep["t1sc"].shape[1]
                      + prep["t2"].shape[0] * prep["t2"].shape[1])
    bytes_accessed = ((x2d.size + NH * WCo) * 4
                      + (prep["t1sc"].size + prep["t2"].size) * itemsize
                      + (prep["s0t"].size + prep["b0t"].size + prep["b1t"].size
                         + prep["nf"].size + prep["nl"].size) * 4)

    # Tiny problem -> gridless single invocation (whole batch + weights < 1 MiB
    # of VMEM); a grid over N/H marked "parallel" only pays off at real sizes.
    vmem = pl.BlockSpec(memory_space=pltpu.MemorySpace.VMEM)
    out2d = pl.pallas_call(
        _preact_block_kernel,
        out_shape=jax.ShapeDtypeStruct((NH, WCo), jnp.float32),
        in_specs=[vmem] * 8,
        out_specs=vmem,
        cost_estimate=pl.CostEstimate(flops=int(flops), transcendentals=0,
                                      bytes_accessed=int(bytes_accessed)),
    )(x2d, prep["s0t"], prep["b0t"], prep["nf"], prep["nl"],
      prep["t1sc"], prep["b1t"], prep["t2"])

    # (N*H, W*Cout) -> (N, Cout, H, W)
    return jnp.transpose(out2d.reshape(N, H, W, Cout), (0, 3, 1, 2))


# ---------------------------- pure-JAX reference -----------------------------
def _conv_nhwc(x, w_hwio, padding):
    return jax.lax.conv_general_dilated(
        x, w_hwio, window_strides=(1, 1), padding=padding,
        dimension_numbers=("NHWC", "HWIO", "NHWC"))


def reference_forward(x_nchw, params):
    x = jnp.transpose(x_nchw, (0, 2, 3, 1)).astype(jnp.float32)
    bn = lambda h, g, b, m, v: (h - m) / jnp.sqrt(v + EPS) * g + b
    pre = jax.nn.relu(bn(x, params["g0"], params["b0"], params["m0"], params["v0"]))
    sc = _conv_nhwc(pre, params["wsc_io"][None, None], "VALID")
    h = _conv_nhwc(pre, params["w1_hwio"], [(1, 1), (1, 1)])
    h = jax.nn.relu(bn(h, params["g1"], params["b1"], params["m1"], params["v1"]))
    h = _conv_nhwc(h, params["w2_hwio"], [(1, 1), (1, 1)])
    out = h + sc
    return jnp.transpose(out, (0, 3, 1, 2))


# ---------------------------------- main --------------------------------------
if __name__ == "__main__":
    N, Cin, Cout, H, W = 2, 4, 8, 16, 16

    key = jax.random.PRNGKey(0)
    keys = jax.random.split(key, 10)

    x = jax.random.normal(keys[0], (N, Cin, H, W), jnp.float32)

    params = {
        # conv weights stored directly in HWIO (PyTorch OIHW -> transpose(2,3,1,0))
        "w1_hwio": jax.random.normal(keys[1], (3, 3, Cin, Cout), jnp.float32) * 0.2,
        "w2_hwio": jax.random.normal(keys[2], (3, 3, Cout, Cout), jnp.float32) * 0.2,
        "wsc_io":  jax.random.normal(keys[3], (Cin, Cout), jnp.float32) * 0.2,
        # BN0 (in_channels), BN1 (out_channels) — inference-mode running stats
        "g0": 1.0 + 0.1 * jax.random.normal(keys[4], (Cin,), jnp.float32),
        "b0": 0.1 * jax.random.normal(keys[5], (Cin,), jnp.float32),
        "m0": 0.1 * jax.random.normal(keys[6], (Cin,), jnp.float32),
        "v0": 0.5 + jax.random.uniform(keys[7], (Cin,), jnp.float32),
        "g1": 1.0 + 0.1 * jax.random.normal(keys[8], (Cout,), jnp.float32),
        "b1": 0.1 * jax.random.normal(keys[9], (Cout,), jnp.float32),
        "m1": jnp.zeros((Cout,), jnp.float32),
        "v1": jnp.ones((Cout,), jnp.float32),
    }

    ref = reference_forward(x, params)
    apply_fn = jax.jit(preact_basic_block)

    # f32 MXU operands: exact PyTorch (eval-mode BN) semantics.
    prep_f32 = prepare_block(params, N=N, H=H, W=W, compute_dtype=jnp.float32)
    out_f32 = jax.block_until_ready(apply_fn(x, prep_f32))
    assert out_f32.shape == (N, Cout, H, W), out_f32.shape
    assert jnp.allclose(out_f32, ref, atol=1e-4, rtol=1e-4), \
        float(jnp.max(jnp.abs(out_f32 - ref)))

    # Default/benchmark path: bf16 MXU operands, f32 accumulation.
    prep_bf16 = prepare_block(params, N=N, H=H, W=W)   # compute_dtype=bf16 default
    out_bf16 = jax.block_until_ready(apply_fn(x, prep_bf16))
    assert out_bf16.shape == (N, Cout, H, W), out_bf16.shape
    assert jnp.allclose(out_bf16, ref, atol=3e-1, rtol=5e-2), \
        float(jnp.max(jnp.abs(out_bf16 - ref)))

    print("KERNEL_OK")
</pallas_src>

<mosaic_0001>
module attributes {stable_mosaic.version = 11 : i64} {
  func.func @_preact_block_kernel(%arg0: memref<32x128xf32, #tpu.memory_space<vmem>>, %arg1: memref<1x128xf32, #tpu.memory_space<vmem>>, %arg2: memref<1x128xf32, #tpu.memory_space<vmem>>, %arg3: memref<32x1xf32, #tpu.memory_space<vmem>>, %arg4: memref<32x1xf32, #tpu.memory_space<vmem>>, %arg5: memref<384x256xf32, #tpu.memory_space<vmem>>, %arg6: memref<1x128xf32, #tpu.memory_space<vmem>>, %arg7: memref<384x128xf32, #tpu.memory_space<vmem>>, %arg8: memref<32x128xf32, #tpu.memory_space<vmem>>) attributes {dimension_semantics = [], scalar_prefetch = 0 : i64, scratch_operands = 0 : i64, tpu.core_type = #tpu.core_type<tc>} {
    %c0 = arith.constant 0 : index
    %c0_0 = arith.constant 0 : index
    %0 = vector.load %arg0[%c0, %c0_0] : memref<32x128xf32, #tpu.memory_space<vmem>>, vector<32x128xf32>
    %c0_1 = arith.constant 0 : index
    %c0_2 = arith.constant 0 : index
    %1 = vector.load %arg1[%c0_1, %c0_2] : memref<1x128xf32, #tpu.memory_space<vmem>>, vector<1x128xf32>
    %2 = vector.broadcast %1 : vector<1x128xf32> to vector<32x128xf32>
    %3 = arith.mulf %0, %2 : vector<32x128xf32>
    %c0_3 = arith.constant 0 : index
    %c0_4 = arith.constant 0 : index
    %4 = vector.load %arg2[%c0_3, %c0_4] : memref<1x128xf32, #tpu.memory_space<vmem>>, vector<1x128xf32>
    %5 = vector.broadcast %4 : vector<1x128xf32> to vector<32x128xf32>
    %6 = arith.addf %3, %5 : vector<32x128xf32>
    %cst = arith.constant 0.000000e+00 : f32
    %7 = vector.broadcast %cst : f32 to vector<32x128xf32>
    %8 = arith.maximumf %6, %7 : vector<32x128xf32>
    %c0_5 = arith.constant 0 : index
    %c0_6 = arith.constant 0 : index
    %9 = vector.load %arg3[%c0_5, %c0_6] : memref<32x1xf32, #tpu.memory_space<vmem>>, vector<32x1xf32>
    %c0_7 = arith.constant 0 : index
    %c0_8 = arith.constant 0 : index
    %10 = vector.load %arg4[%c0_7, %c0_8] : memref<32x1xf32, #tpu.memory_space<vmem>>, vector<32x1xf32>
    %c1_i32 = arith.constant 1 : i32
    %11 = tpu.dynamic_rotate %8 by %c1_i32 dim 0 : vector<32x128xf32>, i32 -> vector<32x128xf32>
    %12 = vector.broadcast %9 : vector<32x1xf32> to vector<32x128xf32>
    %13 = arith.mulf %11, %12 : vector<32x128xf32>
    %c31_i32 = arith.constant 31 : i32
    %14 = tpu.dynamic_rotate %8 by %c31_i32 dim 0 : vector<32x128xf32>, i32 -> vector<32x128xf32>
    %15 = vector.broadcast %10 : vector<32x1xf32> to vector<32x128xf32>
    %16 = arith.mulf %14, %15 : vector<32x128xf32>
    %17 = tpu.concatenate %13, %8, %16 in 1 : vector<32x128xf32>, vector<32x128xf32>, vector<32x128xf32> -> vector<32x384xf32>
    %c0_9 = arith.constant 0 : index
    %c0_10 = arith.constant 0 : index
    %18 = vector.load %arg5[%c0_9, %c0_10] : memref<384x256xf32, #tpu.memory_space<vmem>>, vector<384x256xf32>
    %cst_11 = arith.constant dense<0.000000e+00> : vector<32x256xf32>
    %19 = tpu.matmul %17, %18, %cst_11 {dimension_numbers = #tpu.dot_dimension_numbers<[1], [0], [0], [1], [0, 0, 1, 1], [], []>} : vector<32x384xf32>, vector<384x256xf32>, vector<32x256xf32> -> vector<32x256xf32>
    %20 = vector.extract_strided_slice %19 {offsets = [0, 0], sizes = [32, 128], strides = [1, 1]} : vector<32x256xf32> to vector<32x128xf32>
    %c0_12 = arith.constant 0 : index
    %c0_13 = arith.constant 0 : index
    %21 = vector.load %arg6[%c0_12, %c0_13] : memref<1x128xf32, #tpu.memory_space<vmem>>, vector<1x128xf32>
    %22 = vector.broadcast %21 : vector<1x128xf32> to vector<32x128xf32>
    %23 = arith.addf %20, %22 : vector<32x128xf32>
    %cst_14 = arith.constant 0.000000e+00 : f32
    %24 = vector.broadcast %cst_14 : f32 to vector<32x128xf32>
    %25 = arith.maximumf %23, %24 : vector<32x128xf32>
    %26 = vector.extract_strided_slice %19 {offsets = [0, 128], sizes = [32, 128], strides = [1, 1]} : vector<32x256xf32> to vector<32x128xf32>
    %c1_i32_15 = arith.constant 1 : i32
    %27 = tpu.dynamic_rotate %25 by %c1_i32_15 dim 0 : vector<32x128xf32>, i32 -> vector<32x128xf32>
    %28 = vector.broadcast %9 : vector<32x1xf32> to vector<32x128xf32>
    %29 = arith.mulf %27, %28 : vector<32x128xf32>
    %c31_i32_16 = arith.constant 31 : i32
    %30 = tpu.dynamic_rotate %25 by %c31_i32_16 dim 0 : vector<32x128xf32>, i32 -> vector<32x128xf32>
    %31 = vector.broadcast %10 : vector<32x1xf32> to vector<32x128xf32>
    %32 = arith.mulf %30, %31 : vector<32x128xf32>
    %33 = tpu.concatenate %29, %25, %32 in 1 : vector<32x128xf32>, vector<32x128xf32>, vector<32x128xf32> -> vector<32x384xf32>
    %c0_17 = arith.constant 0 : index
    %c0_18 = arith.constant 0 : index
    %34 = vector.load %arg7[%c0_17, %c0_18] : memref<384x128xf32, #tpu.memory_space<vmem>>, vector<384x128xf32>
    %cst_19 = arith.constant dense<0.000000e+00> : vector<32x128xf32>
    %35 = tpu.matmul %33, %34, %cst_19 {dimension_numbers = #tpu.dot_dimension_numbers<[1], [0], [0], [1], [0, 0, 1, 1], [], []>} : vector<32x384xf32>, vector<384x128xf32>, vector<32x128xf32> -> vector<32x128xf32>
    %36 = arith.addf %35, %26 : vector<32x128xf32>
    %c0_20 = arith.constant 0 : index
    %c0_21 = arith.constant 0 : index
    %37 = vector.load %arg8[%c0_20, %c0_21] : memref<32x128xf32, #tpu.memory_space<vmem>>, vector<32x128xf32>
    tpu.vector_store %arg8[%c0_20, %c0_21], %36 {strides = array<i32>} : memref<32x128xf32, #tpu.memory_space<vmem>>, vector<32x128xf32>,
    return
  }
}

</mosaic_0001>

<llo_original>
// kernel: preact_basic_block.1
$region0: #{preact_basic_block.1}
  #allocation0 [shape = 'u32[]', space=smem, size = 0x4, offset = 0x4, fixed_abs, tag = 'smem constant byte address 0x4 - core index']
  #allocation1 [shape = 'u32[144,128]{1,0:T(1,128)}', space=vmem, size = 0x12000, scoped, tag = 'internal scratch']
  %s0 = inlined_call_operand.vmem [shape: f32[32,128], index: 0, kind: input, shape index: {}]
  %s1 = inlined_call_operand.vmem [shape: f32[1,128], index: 1, kind: input, shape index: {}]
  %s2 = inlined_call_operand.vmem [shape: f32[1,128], index: 2, kind: input, shape index: {}]
  %s3 = inlined_call_operand.vmem [shape: f32[32,1], index: 3, kind: input, shape index: {}]
  %s4 = inlined_call_operand.vmem [shape: f32[32,1], index: 4, kind: input, shape index: {}]
  %s5 = inlined_call_operand.vmem [shape: f32[384,256], index: 5, kind: input, shape index: {}]
  %s6 = inlined_call_operand.vmem [shape: f32[1,128], index: 6, kind: input, shape index: {}]
  %s7 = inlined_call_operand.vmem [shape: f32[384,128], index: 7, kind: input, shape index: {}]
  %s8 = inlined_call_operand.vmem [shape: f32[32,128], index: 8, kind: output, shape index: {}]
  %s9 = sld [smem:[#allocation0]]
  $region42: #{preact_basic_block.1} parent=0
    _
  %s11 = ssub.s32 1, %s9
  %s12 = scalar_select 0, %s11, %s9
  // Predicated region
  $region2: #{preact_basic_block.1} parent=0 // pred_check
    _
  $region3: #{preact_basic_block.1} parent=0 // pred_check_branch
    %14 = sbr.rel (0) target = $region5
  $region4: #{preact_basic_block.1} parent=0 // pred_region
    _
  $region5: #{preact_basic_block.1} parent=0 // pred_fallthru
    _
  // Predicated region
  $region6: #{preact_basic_block.1} parent=0 // pred_check
    _
  $region7: #{preact_basic_block.1} parent=0 // pred_check_branch
    %16 = sbr.rel (0) target = $region9
  $region8: #{preact_basic_block.1} parent=0 // pred_region
    _
  $region9: #{preact_basic_block.1} parent=0 // pred_fallthru
    _
  // Predicated region
  $region10: #{preact_basic_block.1} parent=0 // pred_check
    _
  $region11: #{preact_basic_block.1} parent=0 // pred_check_branch
    %18 = sbr.rel (0) target = $region13
  $region12: #{preact_basic_block.1} parent=0 // pred_region
    _
  $region13: #{preact_basic_block.1} parent=0 // pred_fallthru
    _
  // Predicated region
  $region14: #{preact_basic_block.1} parent=0 // pred_check
    _
  $region15: #{preact_basic_block.1} parent=0 // pred_check_branch
    %20 = sbr.rel (0) target = $region17
  $region16: #{preact_basic_block.1} parent=0 // pred_region
    _
  $region17: #{preact_basic_block.1} parent=0 // pred_fallthru
    _
  // Predicated region
  $region18: #{preact_basic_block.1} parent=0 // pred_check
    _
  $region19: #{preact_basic_block.1} parent=0 // pred_check_branch
    %22 = sbr.rel (0) target = $region21
  $region20: #{preact_basic_block.1} parent=0 // pred_region
    _
  $region21: #{preact_basic_block.1} parent=0 // pred_fallthru
    _
  // Predicated region
  $region22: #{preact_basic_block.1} parent=0 // pred_check
    _
  $region23: #{preact_basic_block.1} parent=0 // pred_check_branch
    %24 = sbr.rel (0) target = $region25
  $region24: #{preact_basic_block.1} parent=0 // pred_region
    _
  $region25: #{preact_basic_block.1} parent=0 // pred_fallthru
    _
  // Predicated region
  $region26: #{preact_basic_block.1} parent=0 // pred_check
    _
  $region27: #{preact_basic_block.1} parent=0 // pred_check_branch
    %26 = sbr.rel (0) target = $region29
  $region28: #{preact_basic_block.1} parent=0 // pred_region
    _
  $region29: #{preact_basic_block.1} parent=0 // pred_fallthru
    _
  // Predicated region
  $region30: #{preact_basic_block.1} parent=0 // pred_check
    _
  $region31: #{preact_basic_block.1} parent=0 // pred_check_branch
    %28 = sbr.rel (0) target = $region33
  $region32: #{preact_basic_block.1} parent=0 // pred_region
    _
  $region33: #{preact_basic_block.1} parent=0 // pred_fallthru
    _
  %v29 = vld [vmem:[%s0] sm:$0xff]
  %v30 = vld [vmem:[%s0 + $0x8] sm:$0xff]
  %v31 = vld [vmem:[%s0 + $0x10] sm:$0xff]
  %v32 = vld [vmem:[%s0 + $0x18] sm:$0xff]
  %v33 = vld [vmem:[%s1] sm:$0x1]
  %v35 = vlaneseq
  %v36 = vshrl.u32 %v35, 7
  %v37 = vsub.s32 0, %v36
  %v38 = vrot.slane %v33, %v37
  %v40 = vmul.f32 %v29, %v38
  %v41 = vmul.f32 %v30, %v38
  %v42 = vmul.f32 %v31, %v38
  %v43 = vmul.f32 %v32, %v38
  %v44 = vld [vmem:[%s2] sm:$0x1]
  %v46 = vlaneseq
  %v47 = vshrl.u32 %v46, 7
  %v48 = vsub.s32 0, %v47
  %v49 = vrot.slane %v44, %v48
  %v51 = vadd.f32 %v40, %v49
  %v52 = vadd.f32 %v41, %v49
  %v53 = vadd.f32 %v42, %v49
  %v54 = vadd.f32 %v43, %v49
  %v55 = vmax.f32 %v51, 0.0
  %v56 = vmax.f32 %v52, 0.0
  %v57 = vmax.f32 %v53, 0.0
  %v58 = vmax.f32 %v54, 0.0
  %v59 = vld [vmem:[%s3] sm:$0xff]
  %v60 = vld [vmem:[%s3 + $0x8] sm:$0xff]
  %v61 = vld [vmem:[%s3 + $0x10] sm:$0xff]
  %v62 = vld [vmem:[%s3 + $0x18] sm:$0xff]
  %v63 = vld [vmem:[%s4] sm:$0xff]
  %v64 = vld [vmem:[%s4 + $0x8] sm:$0xff]
  %v65 = vld [vmem:[%s4 + $0x10] sm:$0xff]
  %v66 = vld [vmem:[%s4 + $0x18] sm:$0xff]
  %v67 = vrot.slane %v55, 7
  %v68 = vrot.slane %v56, 7
  %v69 = vrot.slane %v57, 7
  %v70 = vrot.slane %v58, 7
  %v71 = vlaneseq
  %v72 = vshrl.u32 %v71, 7
  %vm73 = vcmp.lt.s32.totalorder %v72, 1
  %v74 = vsel %vm73, %v69, %v70
  %v75 = vsel %vm73, %v68, %v69
  %v76 = vsel %vm73, %v67, %v68
  %v77 = vsel %vm73, %v70, %v67
  %79 = vset.pattern.permute.xlu0 0
  %80 = vperm.xlu0 %79, %v59
  %v81 = vpop.permute.xlu0 %80
  %84 = vset.pattern.permute.xlu0 0
  %85 = vperm.xlu0 %84, %v60
  %v86 = vpop.permute.xlu0 %85
  %89 = vset.pattern.permute.xlu0 0
  %90 = vperm.xlu0 %89, %v61
  %v91 = vpop.permute.xlu0 %90
  %94 = vset.pattern.permute.xlu0 0
  %95 = vperm.xlu0 %94, %v62
  %v96 = vpop.permute.xlu0 %95
  %v98 = vmul.f32 %v77, %v81
  %v99 = vmul.f32 %v76, %v86
  %v100 = vmul.f32 %v75, %v91
  %v101 = vmul.f32 %v74, %v96
  %v102 = vrot.slane %v55, 1
  %v103 = vrot.slane %v56, 1
  %v104 = vrot.slane %v57, 1
  %v105 = vrot.slane %v58, 1
  %vm106 = vcmp.lt.s32.totalorder %v72, 7
  %v107 = vsel %vm106, %v104, %v105
  %v108 = vsel %vm106, %v103, %v104
  %v109 = vsel %vm106, %v102, %v103
  %v110 = vsel %vm106, %v105, %v102
  %112 = vset.pattern.permute.xlu0 0
  %113 = vperm.xlu0 %112, %v63
  %v114 = vpop.permute.xlu0 %113
  %117 = vset.pattern.permute.xlu0 0
  %118 = vperm.xlu0 %117, %v64
  %v119 = vpop.permute.xlu0 %118
  %122 = vset.pattern.permute.xlu0 0
  %123 = vperm.xlu0 %122, %v65
  %v124 = vpop.permute.xlu0 %123
  %127 = vset.pattern.permute.xlu0 0
  %128 = vperm.xlu0 %127, %v66
  %v129 = vpop.permute.xlu0 %128
  %v131 = vmul.f32 %v109, %v114
  %v132 = vmul.f32 %v108, %v119
  %v133 = vmul.f32 %v107, %v124
  %v134 = vmul.f32 %v110, %v129
  %v135 = vld [vmem:[%s5] sm:$0xff]
  %v136 = vld [vmem:[%s5 + $0x8] sm:$0xff]
  %v137 = vld [vmem:[%s5 + $0x10] sm:$0xff]
  %v138 = vld [vmem:[%s5 + $0x18] sm:$0xff]
  %v139 = vld [vmem:[%s5 + $0x20] sm:$0xff]
  %v140 = vld [vmem:[%s5 + $0x28] sm:$0xff]
  %v141 = vld [vmem:[%s5 + $0x30] sm:$0xff]
  %v142 = vld [vmem:[%s5 + $0x38] sm:$0xff]
  %v143 = vld [vmem:[%s5 + $0x40] sm:$0xff]
  %v144 = vld [vmem:[%s5 + $0x48] sm:$0xff]
  %v145 = vld [vmem:[%s5 + $0x50] sm:$0xff]
  %v146 = vld [vmem:[%s5 + $0x58] sm:$0xff]
  %v147 = vld [vmem:[%s5 + $0x60] sm:$0xff]
  %v148 = vld [vmem:[%s5 + $0x68] sm:$0xff]
  %v149 = vld [vmem:[%s5 + $0x70] sm:$0xff]
  %v150 = vld [vmem:[%s5 + $0x78] sm:$0xff]
  %v151 = vld [vmem:[%s5 + $0x80] sm:$0xff]
  %v152 = vld [vmem:[%s5 + $0x88] sm:$0xff]
  %v153 = vld [vmem:[%s5 + $0x90] sm:$0xff]
  %v154 = vld [vmem:[%s5 + $0x98] sm:$0xff]
  %v155 = vld [vmem:[%s5 + $0xa0] sm:$0xff]
  %v156 = vld [vmem:[%s5 + $0xa8] sm:$0xff]
  %v157 = vld [vmem:[%s5 + $0xb0] sm:$0xff]
  %v158 = vld [vmem:[%s5 + $0xb8] sm:$0xff]
  %v159 = vld [vmem:[%s5 + $0xc0] sm:$0xff]
  %v160 = vld [vmem:[%s5 + $0xc8] sm:$0xff]
  %v161 = vld [vmem:[%s5 + $0xd0] sm:$0xff]
  %v162 = vld [vmem:[%s5 + $0xd8] sm:$0xff]
  %v163 = vld [vmem:[%s5 + $0xe0] sm:$0xff]
  %v164 = vld [vmem:[%s5 + $0xe8] sm:$0xff]
  %v165 = vld [vmem:[%s5 + $0xf0] sm:$0xff]
  %v166 = vld [vmem:[%s5 + $0xf8] sm:$0xff]
  %v167 = vld [vmem:[%s5 + $0x100] sm:$0xff]
  %v168 = vld [vmem:[%s5 + $0x108] sm:$0xff]
  %v169 = vld [vmem:[%s5 + $0x110] sm:$0xff]
  %v170 = vld [vmem:[%s5 + $0x118] sm:$0xff]
  %v171 = vld [vmem:[%s5 + $0x120] sm:$0xff]
  %v172 = vld [vmem:[%s5 + $0x128] sm:$0xff]
  %v173 = vld [vmem:[%s5 + $0x130] sm:$0xff]
  %v174 = vld [vmem:[%s5 + $0x138] sm:$0xff]
  %v175 = vld [vmem:[%s5 + $0x140] sm:$0xff]
  %v176 = vld [vmem:[%s5 + $0x148] sm:$0xff]
  %v177 = vld [vmem:[%s5 + $0x150] sm:$0xff]
  %v178 = vld [vmem:[%s5 + $0x158] sm:$0xff]
  %v179 = vld [vmem:[%s5 + $0x160] sm:$0xff]
  %v180 = vld [vmem:[%s5 + $0x168] sm:$0xff]
  %v181 = vld [vmem:[%s5 + $0x170] sm:$0xff]
  %v182 = vld [vmem:[%s5 + $0x178] sm:$0xff]
  %v183 = vld [vmem:[%s5 + $0x180] sm:$0xff]
  %v184 = vld [vmem:[%s5 + $0x188] sm:$0xff]
  %v185 = vld [vmem:[%s5 + $0x190] sm:$0xff]
  %v186 = vld [vmem:[%s5 + $0x198] sm:$0xff]
  %v187 = vld [vmem:[%s5 + $0x1a0] sm:$0xff]
  %v188 = vld [vmem:[%s5 + $0x1a8] sm:$0xff]
  %v189 = vld [vmem:[%s5 + $0x1b0] sm:$0xff]
  %v190 = vld [vmem:[%s5 + $0x1b8] sm:$0xff]
  %v191 = vld [vmem:[%s5 + $0x1c0] sm:$0xff]
  %v192 = vld [vmem:[%s5 + $0x1c8] sm:$0xff]
  %v193 = vld [vmem:[%s5 + $0x1d0] sm:$0xff]
  %v194 = vld [vmem:[%s5 + $0x1d8] sm:$0xff]
  %v195 = vld [vmem:[%s5 + $0x1e0] sm:$0xff]
  %v196 = vld [vmem:[%s5 + $0x1e8] sm:$0xff]
  %v197 = vld [vmem:[%s5 + $0x1f0] sm:$0xff]
  %v198 = vld [vmem:[%s5 + $0x1f8] sm:$0xff]
  %v199 = vld [vmem:[%s5 + $0x200] sm:$0xff]
  %v200 = vld [vmem:[%s5 + $0x208] sm:$0xff]
  %v201 = vld [vmem:[%s5 + $0x210] sm:$0xff]
  %v202 = vld [vmem:[%s5 + $0x218] sm:$0xff]
  %v203 = vld [vmem:[%s5 + $0x220] sm:$0xff]
  %v204 = vld [vmem:[%s5 + $0x228] sm:$0xff]
  %v205 = vld [vmem:[%s5 + $0x230] sm:$0xff]
  %v206 = vld [vmem:[%s5 + $0x238] sm:$0xff]
  %v207 = vld [vmem:[%s5 + $0x240] sm:$0xff]
  %v208 = vld [vmem:[%s5 + $0x248] sm:$0xff]
  %v209 = vld [vmem:[%s5 + $0x250] sm:$0xff]
  %v210 = vld [vmem:[%s5 + $0x258] sm:$0xff]
  %v211 = vld [vmem:[%s5 + $0x260] sm:$0xff]
  %v212 = vld [vmem:[%s5 + $0x268] sm:$0xff]
  %v213 = vld [vmem:[%s5 + $0x270] sm:$0xff]
  %v214 = vld [vmem:[%s5 + $0x278] sm:$0xff]
  %v215 = vld [vmem:[%s5 + $0x280] sm:$0xff]
  %v216 = vld [vmem:[%s5 + $0x288] sm:$0xff]
  %v217 = vld [vmem:[%s5 + $0x290] sm:$0xff]
  %v218 = vld [vmem:[%s5 + $0x298] sm:$0xff]
  %v219 = vld [vmem:[%s5 + $0x2a0] sm:$0xff]
  %v220 = vld [vmem:[%s5 + $0x2a8] sm:$0xff]
  %v221 = vld [vmem:[%s5 + $0x2b0] sm:$0xff]
  %v222 = vld [vmem:[%s5 + $0x2b8] sm:$0xff]
  %v223 = vld [vmem:[%s5 + $0x2c0] sm:$0xff]
  %v224 = vld [vmem:[%s5 + $0x2c8] sm:$0xff]
  %v225 = vld [vmem:[%s5 + $0x2d0] sm:$0xff]
  %v226 = vld [vmem:[%s5 + $0x2d8] sm:$0xff]
  %v227 = vld [vmem:[%s5 + $0x2e0] sm:$0xff]
  %v228 = vld [vmem:[%s5 + $0x2e8] sm:$0xff]
  %v229 = vld [vmem:[%s5 + $0x2f0] sm:$0xff]
  %v230 = vld [vmem:[%s5 + $0x2f8] sm:$0xff]
  %231 = vmatprep.subr.mxu0 %v166
  %232 = vmatpush1.msra.mxu0 %v165
  %233 = vmatprep.subr.mxu0 %v164
  %234 = vmatpush1.msra.mxu0 %v163
  %235 = vmatprep.subr.mxu0 %v162
  %236 = vmatpush1.msra.mxu0 %v161
  %237 = vmatprep.subr.mxu0 %v160
  %238 = vmatpush1.msra.mxu0 %v159
  %239 = vmatprep.subr.mxu0 %v158
  %240 = vmatpush1.msra.mxu0 %v157
  %241 = vmatprep.subr.mxu0 %v156
  %242 = vmatpush1.msra.mxu0 %v155
  %243 = vmatprep.subr.mxu0 %v154
  %244 = vmatpush1.msra.mxu0 %v153
  %245 = vmatprep.subr.mxu0 %v152
  %246 = vmatpush1.msra.mxu0 %v151
  %247 = vmatprep.subr.mxu0 %v150
  %248 = vmatpush1.msra.mxu0 %v149
  %249 = vmatprep.subr.mxu0 %v148
  %250 = vmatpush1.msra.mxu0 %v147
  %251 = vmatprep.subr.mxu0 %v146
  %252 = vmatpush1.msra.mxu0 %v145
  %253 = vmatprep.subr.mxu0 %v144
  %254 = vmatpush1.msra.mxu0 %v143
  %255 = vmatprep.subr.mxu0 %v142
  %256 = vmatpush1.msra.mxu0 %v141
  %257 = vmatprep.subr.mxu0 %v140
  %258 = vmatpush1.msra.mxu0 %v139
  %259 = vmatprep.subr.mxu0 %v138
  %260 = vmatpush1.msra.mxu0 %v137
  %261 = vmatprep.subr.mxu0 %v136
  %262 = vmatpush1.msra.mxu0 %v135
  %263 = vmatprep.subr.mxu0 %v198
  %264 = vmatpush2.msra.mxu0 %v197
  %265 = vmatprep.subr.mxu0 %v196
  %266 = vmatpush2.msra.mxu0 %v195
  %267 = vmatprep.subr.mxu0 %v194
  %268 = vmatpush2.msra.mxu0 %v193
  %269 = vmatprep.subr.mxu0 %v192
  %270 = vmatpush2.msra.mxu0 %v191
  %271 = vmatprep.subr.mxu0 %v190
  %272 = vmatpush2.msra.mxu0 %v189
  %273 = vmatprep.subr.mxu0 %v188
  %274 = vmatpush2.msra.mxu0 %v187
  %275 = vmatprep.subr.mxu0 %v186
  %276 = vmatpush2.msra.mxu0 %v185
  %277 = vmatprep.subr.mxu0 %v184
  %278 = vmatpush2.msra.mxu0 %v183
  %279 = vmatprep.subr.mxu0 %v182
  %280 = vmatpush2.msra.mxu0 %v181
  %281 = vmatprep.subr.mxu0 %v180
  %282 = vmatpush2.msra.mxu0 %v179
  %283 = vmatprep.subr.mxu0 %v178
  %284 = vmatpush2.msra.mxu0 %v177
  %285 = vmatprep.subr.mxu0 %v176
  %286 = vmatpush2.msra.mxu0 %v175
  %287 = vmatprep.subr.mxu0 %v174
  %288 = vmatpush2.msra.mxu0 %v173
  %289 = vmatprep.subr.mxu0 %v172
  %290 = vmatpush2.msra.mxu0 %v171
  %291 = vmatprep.subr.mxu0 %v170
  %292 = vmatpush2.msra.mxu0 %v169
  %293 = vmatprep.subr.mxu0 %v168
  %294 = vmatpush2.msra.mxu0 %v167
  %295 = vmatprep.mubr.f32.mxu0 %v55
  %296 = vmatmul.mubr.f32.gmra.mxu0 %v98
  %v297 = vpop.f32.mrf.mxu0
  %v298 = vadd.f32 0.0, %v297
  %v299 = vpop.f32.mrf.mxu0
  %v300 = vadd.f32 0.0, %v299
  %301 = vmatprep.mubr.f32.mxu0 %v56
  %302 = vmatmul.mubr.f32.gmra.mxu0 %v99
  %v303 = vpop.f32.mrf.mxu0
  %v304 = vadd.f32 0.0, %v303
  %v305 = vpop.f32.mrf.mxu0
  %v306 = vadd.f32 0.0, %v305
  %307 = vmatprep.mubr.f32.mxu0 %v57
  %308 = vmatmul.mubr.f32.gmra.mxu0 %v100
  %v309 = vpop.f32.mrf.mxu0
  %v310 = vadd.f32 0.0, %v309
  %v311 = vpop.f32.mrf.mxu0
  %v312 = vadd.f32 0.0, %v311
  %313 = vmatprep.mubr.f32.mxu0 %v58
  %314 = vmatmul.mubr.f32.gmra.mxu0 %v101
  %v315 = vpop.f32.mrf.mxu0
  %v316 = vadd.f32 0.0, %v315
  %v317 = vpop.f32.mrf.mxu0
  %v318 = vadd.f32 0.0, %v317
  %319 = vdwg.mxu0
  %320 = vmatprep.subr.mxu0 %v230
  %321 = vmatpush1.msra.mxu0 %v229
  %322 = vmatprep.subr.mxu0 %v228
  %323 = vmatpush1.msra.mxu0 %v227
  %324 = vmatprep.subr.mxu0 %v226
  %325 = vmatpush1.msra.mxu0 %v225
  %326 = vmatprep.subr.mxu0 %v224
  %327 = vmatpush1.msra.mxu0 %v223
  %328 = vmatprep.subr.mxu0 %v222
  %329 = vmatpush1.msra.mxu0 %v221
  %330 = vmatprep.subr.mxu0 %v220
  %331 = vmatpush1.msra.mxu0 %v219
  %332 = vmatprep.subr.mxu0 %v218
  %333 = vmatpush1.msra.mxu0 %v217
  %334 = vmatprep.subr.mxu0 %v216
  %335 = vmatpush1.msra.mxu0 %v215
  %336 = vmatprep.subr.mxu0 %v214
  %337 = vmatpush1.msra.mxu0 %v213
  %338 = vmatprep.subr.mxu0 %v212
  %339 = vmatpush1.msra.mxu0 %v211
  %340 = vmatprep.subr.mxu0 %v210
  %341 = vmatpush1.msra.mxu0 %v209
  %342 = vmatprep.subr.mxu0 %v208
  %343 = vmatpush1.msra.mxu0 %v207
  %344 = vmatprep.subr.mxu0 %v206
  %345 = vmatpush1.msra.mxu0 %v205
  %346 = vmatprep.subr.mxu0 %v204
  %347 = vmatpush1.msra.mxu0 %v203
  %348 = vmatprep.subr.mxu0 %v202
  %349 = vmatpush1.msra.mxu0 %v201
  %350 = vmatprep.subr.mxu0 %v200
  %351 = vmatpush1.msra.mxu0 %v199
  %352 = vmatprep.subr.mxu0 0.0
  %353 = vmatpush2.msra.mxu0 0.0
  %354 = vmatprep.subr.mxu0 0.0
  %355 = vmatpush2.msra.mxu0 0.0
  %356 = vmatprep.subr.mxu0 0.0
  %357 = vmatpush2.msra.mxu0 0.0
  %358 = vmatprep.subr.mxu0 0.0
  %359 = vmatpush2.msra.mxu0 0.0
  %360 = vmatprep.subr.mxu0 0.0
  %361 = vmatpush2.msra.mxu0 0.0
  %362 = vmatprep.subr.mxu0 0.0
  %363 = vmatpush2.msra.mxu0 0.0
  %364 = vmatprep.subr.mxu0 0.0
  %365 = vmatpush2.msra.mxu0 0.0
  %366 = vmatprep.subr.mxu0 0.0
  %367 = vmatpush2.msra.mxu0 0.0
  %368 = vmatprep.subr.mxu0 0.0
  %369 = vmatpush2.msra.mxu0 0.0
  %370 = vmatprep.subr.mxu0 0.0
  %371 = vmatpush2.msra.mxu0 0.0
  %372 = vmatprep.subr.mxu0 0.0
  %373 = vmatpush2.msra.mxu0 0.0
  %374 = vmatprep.subr.mxu0 0.0
  %375 = vmatpush2.msra.mxu0 0.0
  %376 = vmatprep.subr.mxu0 0.0
  %377 = vmatpush2.msra.mxu0 0.0
  %378 = vmatprep.subr.mxu0 0.0
  %379 = vmatpush2.msra.mxu0 0.0
  %380 = vmatprep.subr.mxu0 0.0
  %381 = vmatpush2.msra.mxu0 0.0
  %382 = vmatprep.subr.mxu0 0.0
  %383 = vmatpush2.msra.mxu0 0.0
  %384 = vmatprep.mubr.f32.mxu0 0.0
  %385 = vmatmul.mubr.f32.gmra.mxu0 %v131
  %v386 = vpop.f32.mrf.mxu0
  %v387 = vadd.f32 %v298, %v386
  %v388 = vpop.f32.mrf.mxu0
  %v389 = vadd.f32 %v300, %v388
  %390 = vmatprep.mubr.f32.mxu0 0.0
  %391 = vmatmul.mubr.f32.gmra.mxu0 %v132
  %v392 = vpop.f32.mrf.mxu0
  %v393 = vadd.f32 %v304, %v392
  %v394 = vpop.f32.mrf.mxu0
  %v395 = vadd.f32 %v306, %v394
  %396 = vmatprep.mubr.f32.mxu0 0.0
  %397 = vmatmul.mubr.f32.gmra.mxu0 %v133
  %v398 = vpop.f32.mrf.mxu0
  %v399 = vadd.f32 %v310, %v398
  %v400 = vpop.f32.mrf.mxu0
  %v401 = vadd.f32 %v312, %v400
  %402 = vmatprep.mubr.f32.mxu0 0.0
  %403 = vmatmul.mubr.f32.gmra.mxu0 %v134
  %v404 = vpop.f32.mrf.mxu0
  %v405 = vadd.f32 %v316, %v404
  %v406 = vpop.f32.mrf.mxu0
  %v407 = vadd.f32 %v318, %v406
  %408 = vdwg.mxu0
  %v409 = vld [vmem:[%s6] sm:$0x1]
  %v411 = vlaneseq
  %v412 = vshrl.u32 %v411, 7
  %v413 = vsub.s32 0, %v412
  %v414 = vrot.slane %v409, %v413
  %v416 = vadd.f32 %v387, %v414
  %v417 = vadd.f32 %v393, %v414
  %v418 = vadd.f32 %v399, %v414
  %v419 = vadd.f32 %v405, %v414
  %v420 = vmax.f32 %v416, 0.0
  %v421 = vmax.f32 %v417, 0.0
  %v422 = vmax.f32 %v418, 0.0
  %v423 = vmax.f32 %v419, 0.0
  %v424 = vrot.slane %v420, 7
  %v425 = vrot.slane %v421, 7
  %v426 = vrot.slane %v422, 7
  %v427 = vrot.slane %v423, 7
  %v428 = vsel %vm73, %v426, %v427
  %v429 = vsel %vm73, %v425, %v426
  %v430 = vsel %vm73, %v424, %v425
  %v431 = vsel %vm73, %v427, %v424
  %v432 = vmul.f32 %v431, %v81
  %v433 = vmul.f32 %v430, %v86
  %v434 = vmul.f32 %v429, %v91
  %v435 = vmul.f32 %v428, %v96
  %v436 = vrot.slane %v420, 1
  %v437 = vrot.slane %v421, 1
  %v438 = vrot.slane %v422, 1
  %v439 = vrot.slane %v423, 1
  %v440 = vsel %vm106, %v438, %v439
  %v441 = vsel %vm106, %v437, %v438
  %v442 = vsel %vm106, %v436, %v437
  %v443 = vsel %vm106, %v439, %v436
  %v444 = vmul.f32 %v442, %v114
  %v445 = vmul.f32 %v441, %v119
  %v446 = vmul.f32 %v440, %v124
  %v447 = vmul.f32 %v443, %v129
  %v448 = vld [vmem:[%s7] sm:$0xff]
  %v449 = vld [vmem:[%s7 + $0x8] sm:$0xff]
  %v450 = vld [vmem:[%s7 + $0x10] sm:$0xff]
  %v451 = vld [vmem:[%s7 + $0x18] sm:$0xff]
  %v452 = vld [vmem:[%s7 + $0x20] sm:$0xff]
  %v453 = vld [vmem:[%s7 + $0x28] sm:$0xff]
  %v454 = vld [vmem:[%s7 + $0x30] sm:$0xff]
  %v455 = vld [vmem:[%s7 + $0x38] sm:$0xff]
  %v456 = vld [vmem:[%s7 + $0x40] sm:$0xff]
  %v457 = vld [vmem:[%s7 + $0x48] sm:$0xff]
  %v458 = vld [vmem:[%s7 + $0x50] sm:$0xff]
  %v459 = vld [vmem:[%s7 + $0x58] sm:$0xff]
  %v460 = vld [vmem:[%s7 + $0x60] sm:$0xff]
  %v461 = vld [vmem:[%s7 + $0x68] sm:$0xff]
  %v462 = vld [vmem:[%s7 + $0x70] sm:$0xff]
  %v463 = vld [vmem:[%s7 + $0x78] sm:$0xff]
  %v464 = vld [vmem:[%s7 + $0x80] sm:$0xff]
  %v465 = vld [vmem:[%s7 + $0x88] sm:$0xff]
  %v466 = vld [vmem:[%s7 + $0x90] sm:$0xff]
  %v467 = vld [vmem:[%s7 + $0x98] sm:$0xff]
  %v468 = vld [vmem:[%s7 + $0xa0] sm:$0xff]
  %v469 = vld [vmem:[%s7 + $0xa8] sm:$0xff]
  %v470 = vld [vmem:[%s7 + $0xb0] sm:$0xff]
  %v471 = vld [vmem:[%s7 + $0xb8] sm:$0xff]
  %v472 = vld [vmem:[%s7 + $0xc0] sm:$0xff]
  %v473 = vld [vmem:[%s7 + $0xc8] sm:$0xff]
  %v474 = vld [vmem:[%s7 + $0xd0] sm:$0xff]
  %v475 = vld [vmem:[%s7 + $0xd8] sm:$0xff]
  %v476 = vld [vmem:[%s7 + $0xe0] sm:$0xff]
  %v477 = vld [vmem:[%s7 + $0xe8] sm:$0xff]
  %v478 = vld [vmem:[%s7 + $0xf0] sm:$0xff]
  %v479 = vld [vmem:[%s7 + $0xf8] sm:$0xff]
  %v480 = vld [vmem:[%s7 + $0x100] sm:$0xff]
  %v481 = vld [vmem:[%s7 + $0x108] sm:$0xff]
  %v482 = vld [vmem:[%s7 + $0x110] sm:$0xff]
  %v483 = vld [vmem:[%s7 + $0x118] sm:$0xff]
  %v484 = vld [vmem:[%s7 + $0x120] sm:$0xff]
  %v485 = vld [vmem:[%s7 + $0x128] sm:$0xff]
  %v486 = vld [vmem:[%s7 + $0x130] sm:$0xff]
  %v487 = vld [vmem:[%s7 + $0x138] sm:$0xff]
  %v488 = vld [vmem:[%s7 + $0x140] sm:$0xff]
  %v489 = vld [vmem:[%s7 + $0x148] sm:$0xff]
  %v490 = vld [vmem:[%s7 + $0x150] sm:$0xff]
  %v491 = vld [vmem:[%s7 + $0x158] sm:$0xff]
  %v492 = vld [vmem:[%s7 + $0x160] sm:$0xff]
  %v493 = vld [vmem:[%s7 + $0x168] sm:$0xff]
  %v494 = vld [vmem:[%s7 + $0x170] sm:$0xff]
  %v495 = vld [vmem:[%s7 + $0x178] sm:$0xff]
  %496 = vmatprep.subr.mxu0 0.0
  %497 = vmatpush1.msra.mxu0 %v463
  %498 = vmatprep.subr.mxu0 0.0
  %499 = vmatpush1.msra.mxu0 %v462
  %500 = vmatprep.subr.mxu0 0.0
  %501 = vmatpush1.msra.mxu0 %v461
  %502 = vmatprep.subr.mxu0 0.0
  %503 = vmatpush1.msra.mxu0 %v460
  %504 = vmatprep.subr.mxu0 0.0
  %505 = vmatpush1.msra.mxu0 %v459
  %506 = vmatprep.subr.mxu0 0.0
  %507 = vmatpush1.msra.mxu0 %v458
  %508 = vmatprep.subr.mxu0 0.0
  %509 = vmatpush1.msra.mxu0 %v457
  %510 = vmatprep.subr.mxu0 0.0
  %511 = vmatpush1.msra.mxu0 %v456
  %512 = vmatprep.subr.mxu0 0.0
  %513 = vmatpush1.msra.mxu0 %v455
  %514 = vmatprep.subr.mxu0 0.0
  %515 = vmatpush1.msra.mxu0 %v454
  %516 = vmatprep.subr.mxu0 0.0
  %517 = vmatpush1.msra.mxu0 %v453
  %518 = vmatprep.subr.mxu0 0.0
  %519 = vmatpush1.msra.mxu0 %v452
  %520 = vmatprep.subr.mxu0 0.0
  %521 = vmatpush1.msra.mxu0 %v451
  %522 = vmatprep.subr.mxu0 0.0
  %523 = vmatpush1.msra.mxu0 %v450
  %524 = vmatprep.subr.mxu0 0.0
  %525 = vmatpush1.msra.mxu0 %v449
  %526 = vmatprep.subr.mxu0 0.0
  %527 = vmatpush1.msra.mxu0 %v448
  %528 = vmatprep.subr.mxu0 0.0
  %529 = vmatpush2.msra.mxu0 %v479
  %530 = vmatprep.subr.mxu0 0.0
  %531 = vmatpush2.msra.mxu0 %v478
  %532 = vmatprep.subr.mxu0 0.0
  %533 = vmatpush2.msra.mxu0 %v477
  %534 = vmatprep.subr.mxu0 0.0
  %535 = vmatpush2.msra.mxu0 %v476
  %536 = vmatprep.subr.mxu0 0.0
  %537 = vmatpush2.msra.mxu0 %v475
  %538 = vmatprep.subr.mxu0 0.0
  %539 = vmatpush2.msra.mxu0 %v474
  %540 = vmatprep.subr.mxu0 0.0
  %541 = vmatpush2.msra.mxu0 %v473
  %542 = vmatprep.subr.mxu0 0.0
  %543 = vmatpush2.msra.mxu0 %v472
  %544 = vmatprep.subr.mxu0 0.0
  %545 = vmatpush2.msra.mxu0 %v471
  %546 = vmatprep.subr.mxu0 0.0
  %547 = vmatpush2.msra.mxu0 %v470
  %548 = vmatprep.subr.mxu0 0.0
  %549 = vmatpush2.msra.mxu0 %v469
  %550 = vmatprep.subr.mxu0 0.0
  %551 = vmatpush2.msra.mxu0 %v468
  %552 = vmatprep.subr.mxu0 0.0
  %553 = vmatpush2.msra.mxu0 %v467
  %554 = vmatprep.subr.mxu0 0.0
  %555 = vmatpush2.msra.mxu0 %v466
  %556 = vmatprep.subr.mxu0 0.0
  %557 = vmatpush2.msra.mxu0 %v465
  %558 = vmatprep.subr.mxu0 0.0
  %559 = vmatpush2.msra.mxu0 %v464
  %560 = vmatprep.mubr.f32.mxu0 %v420
  %561 = vmatmul.mubr.f32.gmra.mxu0 %v432
  %v562 = vpop.f32.mrf.mxu0
  %v563 = vadd.f32 %v389, %v562
  %v564 = vpop.f32.mrf.mxu0
  %565 = vmatprep.mubr.f32.mxu0 %v421
  %566 = vmatmul.mubr.f32.gmra.mxu0 %v433
  %v567 = vpop.f32.mrf.mxu0
  %v568 = vadd.f32 %v395, %v567
  %v569 = vpop.f32.mrf.mxu0
  %570 = vmatprep.mubr.f32.mxu0 %v422
  %571 = vmatmul.mubr.f32.gmra.mxu0 %v434
  %v572 = vpop.f32.mrf.mxu0
  %v573 = vadd.f32 %v401, %v572
  %v574 = vpop.f32.mrf.mxu0
  %575 = vmatprep.mubr.f32.mxu0 %v423
  %576 = vmatmul.mubr.f32.gmra.mxu0 %v435
  %v577 = vpop.f32.mrf.mxu0
  %v578 = vadd.f32 %v407, %v577
  %v579 = vpop.f32.mrf.mxu0
  %580 = vdwg.mxu0
  %581 = vmatprep.subr.mxu0 0.0
  %582 = vmatpush1.msra.mxu0 %v495
  %583 = vmatprep.subr.mxu0 0.0
  %584 = vmatpush1.msra.mxu0 %v494
  %585 = vmatprep.subr.mxu0 0.0
  %586 = vmatpush1.msra.mxu0 %v493
  %587 = vmatprep.subr.mxu0 0.0
  %588 = vmatpush1.msra.mxu0 %v492
  %589 = vmatprep.subr.mxu0 0.0
  %590 = vmatpush1.msra.mxu0 %v491
  %591 = vmatprep.subr.mxu0 0.0
  %592 = vmatpush1.msra.mxu0 %v490
  %593 = vmatprep.subr.mxu0 0.0
  %594 = vmatpush1.msra.mxu0 %v489
  %595 = vmatprep.subr.mxu0 0.0
  %596 = vmatpush1.msra.mxu0 %v488
  %597 = vmatprep.subr.mxu0 0.0
  %598 = vmatpush1.msra.mxu0 %v487
  %599 = vmatprep.subr.mxu0 0.0
  %600 = vmatpush1.msra.mxu0 %v486
  %601 = vmatprep.subr.mxu0 0.0
  %602 = vmatpush1.msra.mxu0 %v485
  %603 = vmatprep.subr.mxu0 0.0
  %604 = vmatpush1.msra.mxu0 %v484
  %605 = vmatprep.subr.mxu0 0.0
  %606 = vmatpush1.msra.mxu0 %v483
  %607 = vmatprep.subr.mxu0 0.0
  %608 = vmatpush1.msra.mxu0 %v482
  %609 = vmatprep.subr.mxu0 0.0
  %610 = vmatpush1.msra.mxu0 %v481
  %611 = vmatprep.subr.mxu0 0.0
  %612 = vmatpush1.msra.mxu0 %v480
  %613 = vmatprep.subr.mxu0 0.0
  %614 = vmatpush2.msra.mxu0 0.0
  %615 = vmatprep.subr.mxu0 0.0
  %616 = vmatpush2.msra.mxu0 0.0
  %617 = vmatprep.subr.mxu0 0.0
  %618 = vmatpush2.msra.mxu0 0.0
  %619 = vmatprep.subr.mxu0 0.0
  %620 = vmatpush2.msra.mxu0 0.0
  %621 = vmatprep.subr.mxu0 0.0
  %622 = vmatpush2.msra.mxu0 0.0
  %623 = vmatprep.subr.mxu0 0.0
  %624 = vmatpush2.msra.mxu0 0.0
  %625 = vmatprep.subr.mxu0 0.0
  %626 = vmatpush2.msra.mxu0 0.0
  %627 = vmatprep.subr.mxu0 0.0
  %628 = vmatpush2.msra.mxu0 0.0
  %629 = vmatprep.subr.mxu0 0.0
  %630 = vmatpush2.msra.mxu0 0.0
  %631 = vmatprep.subr.mxu0 0.0
  %632 = vmatpush2.msra.mxu0 0.0
  %633 = vmatprep.subr.mxu0 0.0
  %634 = vmatpush2.msra.mxu0 0.0
  %635 = vmatprep.subr.mxu0 0.0
  %636 = vmatpush2.msra.mxu0 0.0
  %637 = vmatprep.subr.mxu0 0.0
  %638 = vmatpush2.msra.mxu0 0.0
  %639 = vmatprep.subr.mxu0 0.0
  %640 = vmatpush2.msra.mxu0 0.0
  %641 = vmatprep.subr.mxu0 0.0
  %642 = vmatpush2.msra.mxu0 0.0
  %643 = vmatprep.subr.mxu0 0.0
  %644 = vmatpush2.msra.mxu0 0.0
  %645 = vmatprep.mubr.f32.mxu0 0.0
  %646 = vmatmul.mubr.f32.gmra.mxu0 %v444
  %v647 = vpop.f32.mrf.mxu0
  %v648 = vadd.f32 %v563, %v647
  %v649 = vpop.f32.mrf.mxu0
  %650 = vmatprep.mubr.f32.mxu0 0.0
  %651 = vmatmul.mubr.f32.gmra.mxu0 %v445
  %v652 = vpop.f32.mrf.mxu0
  %v653 = vadd.f32 %v568, %v652
  %v654 = vpop.f32.mrf.mxu0
  %655 = vmatprep.mubr.f32.mxu0 0.0
  %656 = vmatmul.mubr.f32.gmra.mxu0 %v446
  %v657 = vpop.f32.mrf.mxu0
  %v658 = vadd.f32 %v573, %v657
  %v659 = vpop.f32.mrf.mxu0
  %660 = vmatprep.mubr.f32.mxu0 0.0
  %661 = vmatmul.mubr.f32.gmra.mxu0 %v447
  %v662 = vpop.f32.mrf.mxu0
  %v663 = vadd.f32 %v578, %v662
  %v664 = vpop.f32.mrf.mxu0
  %665 = vdwg.mxu0
  %666 = vst [vmem:[%s8] sm:$0xff] %v648
  %667 = vst [vmem:[%s8 + $0x8] sm:$0xff] %v653
  %668 = vst [vmem:[%s8 + $0x10] sm:$0xff] %v658
  %669 = vst [vmem:[%s8 + $0x18] sm:$0xff] %v663
  // Predicated region
  $region34: #{preact_basic_block.1} parent=0 // pred_check
    _
  $region35: #{preact_basic_block.1} parent=0 // pred_check_branch
    %671 = sbr.rel (0) target = $region37
  $region36: #{preact_basic_block.1} parent=0 // pred_region
    _
  $region37: #{preact_basic_block.1} parent=0 // pred_fallthru
    _
  // Predicated region
  $region38: #{preact_basic_block.1} parent=0 // pred_check
    _
  $region39: #{preact_basic_block.1} parent=0 // pred_check_branch
    %673 = sbr.rel (0) target = $region41
  $region40: #{preact_basic_block.1} parent=0 // pred_region
    _
  $region41: #{preact_basic_block.1} parent=0 // pred_fallthru
    _

</llo_original>
